<compile_context>
chip_gen: v5e
topology: v5e:2x2
jax: 0.10.0
libtpu: 0.0.40
codegen_flags: <defaults>
</compile_context>

<pallas_src>
import jax
import jax.numpy as jnp
from jax.experimental import pallas as pl
from jax.experimental.pallas import tpu as pltpu

_EPS = 1e-5  # nn.LayerNorm default eps


def _round_up(x, m):
    return (x + m - 1) // m * m


def _layernorm(h, g, t):
    mu = jnp.mean(h, axis=-1, keepdims=True)
    var = jnp.mean(jnp.square(h - mu), axis=-1, keepdims=True)
    return (h - mu) * jax.lax.rsqrt(var + _EPS) * g + t


def _mlp_rows(x, w0, v0, w1, v1, w2, b2):
    """Linear -> LayerNorm -> ReLU (x2) -> Linear over a (tile_m, Din) row tile."""
    b0, g0, t0 = v0[0:1, :], v0[1:2, :], v0[2:3, :]
    b1, g1, t1 = v1[0:1, :], v1[1:2, :], v1[2:3, :]

    # Layer 0: K = Din (2..4) is degenerate for the MXU -> unrolled VPU FMAs.
    din = x.shape[-1]
    h = x[:, 0:1] * w0[0:1, :]
    for d in range(1, din):
        h = h + x[:, d:d + 1] * w0[d:d + 1, :]
    h = jnp.maximum(_layernorm(h + b0, g0, t0), 0.0)

    # Layers 1 & 2 on the MXU (bf16 inputs if weights were cast; f32 accumulate).
    h = jnp.dot(h.astype(w1.dtype), w1, preferred_element_type=jnp.float32) + b1
    h = jnp.maximum(_layernorm(h, g1, t1), 0.0)
    return jnp.dot(h.astype(w2.dtype), w2, preferred_element_type=jnp.float32) + b2


def _kernel_no_desc(x_ref, w0, v0, w1, v1, w2, b2, out_ref):
    enc = _mlp_rows(x_ref[...], w0[...], v0[...], w1[...], v1[...], w2[...], b2[...])
    out_ref[...] = enc.astype(out_ref.dtype)


def _kernel_with_desc(x_ref, w0, v0, w1, v1, w2, b2, desc_ref, out_ref):
    enc = _mlp_rows(x_ref[...], w0[...], v0[...], w1[...], v1[...], w2[...], b2[...])
    out_ref[...] = (desc_ref[...] + enc).astype(out_ref.dtype)


def init_params(key, inp_dim, layers, feature_dim):
    """Deterministic params matching nn.Linear default init; last-layer bias = 0."""
    channels = [inp_dim] + list(layers) + [feature_dim]
    n = len(channels)
    params = []
    for i in range(1, n):
        key, k1, k2 = jax.random.split(key, 3)
        fan_in = channels[i - 1]
        bound = 1.0 / (fan_in ** 0.5)
        w = jax.random.uniform(k1, (channels[i - 1], channels[i]),
                               jnp.float32, -bound, bound)
        if i < n - 1:
            b = jax.random.uniform(k2, (1, channels[i]), jnp.float32, -bound, bound)
            gamma = jnp.ones((1, channels[i]), jnp.float32)   # LayerNorm weight
            beta = jnp.zeros((1, channels[i]), jnp.float32)   # LayerNorm bias
            params.append((w, b, gamma, beta))
        else:
            b = jnp.zeros((1, channels[i]), jnp.float32)       # nn.init.constant_(..., 0.0)
            params.append((w, b))
    return params


def keypoint_encoding_linear(kpts, params, descriptors=None, *, tile_m=512,
                             use_bf16_matmul=False):
    """Pallas forward of KeypointEncoding_linear (layernorm MLP branch).

    kpts:        (B, L, Din) float
    descriptors: (B, C, L) float or None
    returns:     (B, C, L) if descriptors is not None, else (B, L, C)
    """
    B, L, Din = kpts.shape
    (w0, b0, g0, t0), (w1, b1, g1, t1), (w2, b2) = params
    C0, C1, C = w0.shape[1], w1.shape[1], w2.shape[1]

    # Coalesce (bias, gamma, beta) per LayerNorm layer into one resident slab each.
    v0 = jnp.concatenate([b0, g0, t0], axis=0).astype(jnp.float32)   # (3, C0)
    v1 = jnp.concatenate([b1, g1, t1], axis=0).astype(jnp.float32)   # (3, C1)
    if use_bf16_matmul:
        w1m, w2m = w1.astype(jnp.bfloat16), w2.astype(jnp.bfloat16)
    else:
        w1m, w2m = w1, w2
    w0f = w0.astype(jnp.float32)
    b2f = b2.astype(jnp.float32)

    # Flatten (B, L) -> rows and pick a row tile (multiple of 8 sublanes).
    M = B * L
    tile_m = max(8, _round_up(min(int(tile_m), _round_up(M, 8)), 8))
    Mp = _round_up(M, tile_m)
    grid = (Mp // tile_m,)

    x = kpts.reshape(M, Din).astype(jnp.float32)
    if Mp != M:
        x = jnp.pad(x, ((0, Mp - M), (0, 0)))

    param_args = [w0f, v0, w1m, v1, w2m, b2f]
    param_specs = [pl.BlockSpec(a.shape, lambda i: (0, 0)) for a in param_args]
    x_spec = pl.BlockSpec((tile_m, Din), lambda i: (i, 0))
    out_spec = pl.BlockSpec((tile_m, C), lambda i: (i, 0))

    param_bytes = sum(int(a.size) * a.dtype.itemsize for a in param_args)
    flops = 2 * Mp * (Din * C0 + C0 * C1 + C1 * C)
    act_bytes = Mp * Din * 4 + Mp * C * 4 * (2 if descriptors is not None else 1)
    cost = pl.CostEstimate(flops=flops, transcendentals=2 * Mp,
                           bytes_accessed=act_bytes + param_bytes)

    # Budget VMEM: double-buffered row tiles + resident params (+ headroom).
    tile_bytes = tile_m * (Din + 2 * C) * 4
    vmem_needed = 2 * 2 * tile_bytes + 2 * param_bytes + (2 << 20)
    compiler_params = pltpu.CompilerParams(
        dimension_semantics=("parallel",),
        vmem_limit_bytes=int(min(64 << 20, max(2 * vmem_needed, 32 << 20))),
    )

    if descriptors is None:
        out = pl.pallas_call(
            _kernel_no_desc,
            out_shape=jax.ShapeDtypeStruct((Mp, C), jnp.float32),
            grid=grid,
            in_specs=[x_spec] + param_specs,
            out_specs=out_spec,
            compiler_params=compiler_params,
            cost_estimate=cost,
        )(x, *param_args)
        return out[:M].reshape(B, L, C)
    else:
        Bd, Cd, Ld = descriptors.shape
        assert Bd == B and Cd == C and Ld == L
        # One XLA transpose in the wrapper -> lane-dense (rows, C) layout in-kernel.
        desc_lc = jnp.swapaxes(descriptors, 1, 2).reshape(M, C).astype(jnp.float32)
        if Mp != M:
            desc_lc = jnp.pad(desc_lc, ((0, Mp - M), (0, 0)))
        desc_spec = pl.BlockSpec((tile_m, C), lambda i: (i, 0))
        out = pl.pallas_call(
            _kernel_with_desc,
            out_shape=jax.ShapeDtypeStruct((Mp, C), jnp.float32),
            grid=grid,
            in_specs=[x_spec] + param_specs + [desc_spec],
            out_specs=out_spec,
            compiler_params=compiler_params,
            cost_estimate=cost,
        )(x, *param_args, desc_lc)
        out = out[:M].reshape(B, L, C)
        return jnp.swapaxes(out, 1, 2).astype(descriptors.dtype)   # (B, C, L)


def ref_forward(kpts, params, descriptors=None):
    """Pure-JAX reference of the PyTorch forward (layernorm MLP)."""
    (w0, b0, g0, t0), (w1, b1, g1, t1), (w2, b2) = params

    def ln(h, g, t):
        mu = h.mean(-1, keepdims=True)
        var = ((h - mu) ** 2).mean(-1, keepdims=True)
        return (h - mu) / jnp.sqrt(var + _EPS) * g + t

    h = jnp.maximum(ln(kpts @ w0 + b0, g0, t0), 0.0)
    h = jnp.maximum(ln(h @ w1 + b1, g1, t1), 0.0)
    enc = h @ w2 + b2
    if descriptors is None:
        return enc
    return descriptors + jnp.swapaxes(enc, 1, 2)


if __name__ == "__main__":
    B, L = 2, 8
    inp_dim, layers, feature_dim = 4, [32, 32], 32

    key = jax.random.PRNGKey(0)
    kp_key, desc_key, param_key, kp2_key = jax.random.split(key, 4)

    kpts = jax.random.normal(kp_key, (B, L, inp_dim), jnp.float32)
    descriptors = jax.random.normal(desc_key, (B, feature_dim, L), jnp.float32)
    params = init_params(param_key, inp_dim, layers, feature_dim)

    # Path 1: descriptors provided -> output (B, C, L)
    out_desc = jax.block_until_ready(keypoint_encoding_linear(kpts, params, descriptors))
    ref_desc = ref_forward(kpts, params, descriptors)
    assert out_desc.shape == (B, feature_dim, L)
    assert jnp.allclose(out_desc, ref_desc, rtol=1e-5, atol=1e-5)

    # Path 2: descriptors=None -> output (B, L, C)
    out_enc = jax.block_until_ready(keypoint_encoding_linear(kpts, params, None))
    ref_enc = ref_forward(kpts, params, None)
    assert out_enc.shape == (B, L, feature_dim)
    assert jnp.allclose(out_enc, ref_enc, rtol=1e-5, atol=1e-5)

    # Path 3: B*L not a multiple of the tile -> remainder padding path.
    kpts_odd = jax.random.normal(kp2_key, (B, 9, inp_dim), jnp.float32)
    out_odd = jax.block_until_ready(keypoint_encoding_linear(kpts_odd, params, None))
    ref_odd = ref_forward(kpts_odd, params, None)
    assert out_odd.shape == (B, 9, feature_dim)
    assert jnp.allclose(out_odd, ref_odd, rtol=1e-5, atol=1e-5)

    # Path 4: multi-step grid (resident weights across steps), small tile override.
    out_grid = jax.block_until_ready(
        keypoint_encoding_linear(kpts, params, descriptors, tile_m=8))
    assert jnp.allclose(out_grid, ref_desc, rtol=1e-5, atol=1e-5)

    # Path 5: bf16 MXU inputs with f32 accumulation (v6e/v7x fast path), looser tol.
    out_bf16 = jax.block_until_ready(
        keypoint_encoding_linear(kpts, params, descriptors, use_bf16_matmul=True))
    assert jnp.allclose(out_bf16, ref_desc, rtol=1e-1, atol=1e-1)

    print("KERNEL_OK")
</pallas_src>

<mosaic_0001>
module attributes {stable_mosaic.version = 11 : i64} {
  func.func @_kernel_with_desc(%arg0: i32, %arg1: memref<16x4xf32, #tpu.memory_space<vmem>>, %arg2: memref<4x32xf32, #tpu.memory_space<vmem>>, %arg3: memref<3x32xf32, #tpu.memory_space<vmem>>, %arg4: memref<32x32xf32, #tpu.memory_space<vmem>>, %arg5: memref<3x32xf32, #tpu.memory_space<vmem>>, %arg6: memref<32x32xf32, #tpu.memory_space<vmem>>, %arg7: memref<1x32xf32, #tpu.memory_space<vmem>>, %arg8: memref<16x32xf32, #tpu.memory_space<vmem>>, %arg9: memref<16x32xf32, #tpu.memory_space<vmem>>) attributes {dimension_semantics = [#tpu.dimension_semantics<parallel>], iteration_bounds = array<i64: 1>, scalar_prefetch = 0 : i64, scratch_operands = 0 : i64, tpu.core_type = #tpu.core_type<tc>, window_params = [{transform_indices = @transform_0, window_bounds = array<i64: 16, 4>}, {pipeline_mode = #tpu.pipeline_mode<synchronous>, transform_indices = @transform_1, window_bounds = array<i64: 4, 32>}, {pipeline_mode = #tpu.pipeline_mode<synchronous>, transform_indices = @transform_2, window_bounds = array<i64: 3, 32>}, {pipeline_mode = #tpu.pipeline_mode<synchronous>, transform_indices = @transform_3, window_bounds = array<i64: 32, 32>}, {pipeline_mode = #tpu.pipeline_mode<synchronous>, transform_indices = @transform_4, window_bounds = array<i64: 3, 32>}, {pipeline_mode = #tpu.pipeline_mode<synchronous>, transform_indices = @transform_5, window_bounds = array<i64: 32, 32>}, {pipeline_mode = #tpu.pipeline_mode<synchronous>, transform_indices = @transform_6, window_bounds = array<i64: 1, 32>}, {transform_indices = @transform_7, window_bounds = array<i64: 16, 32>}, {transform_indices = @transform_8, window_bounds = array<i64: 16, 32>}]} {
    %c0 = arith.constant 0 : index
    %c0_0 = arith.constant 0 : index
    %0 = vector.load %arg1[%c0, %c0_0] : memref<16x4xf32, #tpu.memory_space<vmem>>, vector<16x4xf32>
    %c0_1 = arith.constant 0 : index
    %c0_2 = arith.constant 0 : index
    %1 = vector.load %arg2[%c0_1, %c0_2] : memref<4x32xf32, #tpu.memory_space<vmem>>, vector<4x32xf32>
    %c0_3 = arith.constant 0 : index
    %c0_4 = arith.constant 0 : index
    %2 = vector.load %arg3[%c0_3, %c0_4] : memref<3x32xf32, #tpu.memory_space<vmem>>, vector<3x32xf32>
    %c0_5 = arith.constant 0 : index
    %c0_6 = arith.constant 0 : index
    %3 = vector.load %arg4[%c0_5, %c0_6] : memref<32x32xf32, #tpu.memory_space<vmem>>, vector<32x32xf32>
    %c0_7 = arith.constant 0 : index
    %c0_8 = arith.constant 0 : index
    %4 = vector.load %arg5[%c0_7, %c0_8] : memref<3x32xf32, #tpu.memory_space<vmem>>, vector<3x32xf32>
    %c0_9 = arith.constant 0 : index
    %c0_10 = arith.constant 0 : index
    %5 = vector.load %arg6[%c0_9, %c0_10] : memref<32x32xf32, #tpu.memory_space<vmem>>, vector<32x32xf32>
    %c0_11 = arith.constant 0 : index
    %c0_12 = arith.constant 0 : index
    %6 = vector.load %arg7[%c0_11, %c0_12] : memref<1x32xf32, #tpu.memory_space<vmem>>, vector<1x32xf32>
    %7 = vector.extract_strided_slice %2 {offsets = [0, 0], sizes = [1, 32], strides = [1, 1]} : vector<3x32xf32> to vector<1x32xf32>
    %8 = vector.extract_strided_slice %2 {offsets = [1, 0], sizes = [1, 32], strides = [1, 1]} : vector<3x32xf32> to vector<1x32xf32>
    %9 = vector.extract_strided_slice %2 {offsets = [2, 0], sizes = [1, 32], strides = [1, 1]} : vector<3x32xf32> to vector<1x32xf32>
    %10 = vector.extract_strided_slice %4 {offsets = [0, 0], sizes = [1, 32], strides = [1, 1]} : vector<3x32xf32> to vector<1x32xf32>
    %11 = vector.extract_strided_slice %4 {offsets = [1, 0], sizes = [1, 32], strides = [1, 1]} : vector<3x32xf32> to vector<1x32xf32>
    %12 = vector.extract_strided_slice %4 {offsets = [2, 0], sizes = [1, 32], strides = [1, 1]} : vector<3x32xf32> to vector<1x32xf32>
    %13 = vector.extract_strided_slice %0 {offsets = [0, 0], sizes = [16, 1], strides = [1, 1]} : vector<16x4xf32> to vector<16x1xf32>
    %14 = vector.extract_strided_slice %1 {offsets = [0, 0], sizes = [1, 32], strides = [1, 1]} : vector<4x32xf32> to vector<1x32xf32>
    %15 = vector.broadcast %13 : vector<16x1xf32> to vector<16x32xf32>
    %16 = vector.broadcast %14 : vector<1x32xf32> to vector<16x32xf32>
    %17 = arith.mulf %15, %16 : vector<16x32xf32>
    %18 = vector.extract_strided_slice %0 {offsets = [0, 1], sizes = [16, 1], strides = [1, 1]} : vector<16x4xf32> to vector<16x1xf32>
    %19 = vector.extract_strided_slice %1 {offsets = [1, 0], sizes = [1, 32], strides = [1, 1]} : vector<4x32xf32> to vector<1x32xf32>
    %20 = vector.broadcast %18 : vector<16x1xf32> to vector<16x32xf32>
    %21 = vector.broadcast %19 : vector<1x32xf32> to vector<16x32xf32>
    %22 = arith.mulf %20, %21 : vector<16x32xf32>
    %23 = arith.addf %17, %22 : vector<16x32xf32>
    %24 = vector.extract_strided_slice %0 {offsets = [0, 2], sizes = [16, 1], strides = [1, 1]} : vector<16x4xf32> to vector<16x1xf32>
    %25 = vector.extract_strided_slice %1 {offsets = [2, 0], sizes = [1, 32], strides = [1, 1]} : vector<4x32xf32> to vector<1x32xf32>
    %26 = vector.broadcast %24 : vector<16x1xf32> to vector<16x32xf32>
    %27 = vector.broadcast %25 : vector<1x32xf32> to vector<16x32xf32>
    %28 = arith.mulf %26, %27 : vector<16x32xf32>
    %29 = arith.addf %23, %28 : vector<16x32xf32>
    %30 = vector.extract_strided_slice %0 {offsets = [0, 3], sizes = [16, 1], strides = [1, 1]} : vector<16x4xf32> to vector<16x1xf32>
    %31 = vector.extract_strided_slice %1 {offsets = [3, 0], sizes = [1, 32], strides = [1, 1]} : vector<4x32xf32> to vector<1x32xf32>
    %32 = vector.broadcast %30 : vector<16x1xf32> to vector<16x32xf32>
    %33 = vector.broadcast %31 : vector<1x32xf32> to vector<16x32xf32>
    %34 = arith.mulf %32, %33 : vector<16x32xf32>
    %35 = arith.addf %29, %34 : vector<16x32xf32>
    %36 = vector.broadcast %7 : vector<1x32xf32> to vector<16x32xf32>
    %37 = arith.addf %35, %36 : vector<16x32xf32>
    %cst = arith.constant dense<0.000000e+00> : vector<16xf32>
    %38 = vector.multi_reduction <add>, %37, %cst [1] : vector<16x32xf32> to vector<16xf32>
    %39 = vector.shape_cast %38 : vector<16xf32> to vector<16x1xf32>
    %cst_13 = arith.constant 3.200000e+01 : f32
    %40 = vector.broadcast %cst_13 : f32 to vector<16x1xf32>
    %41 = arith.divf %39, %40 : vector<16x1xf32>
    %42 = vector.broadcast %41 : vector<16x1xf32> to vector<16x32xf32>
    %43 = arith.subf %37, %42 : vector<16x32xf32>
    %44 = arith.mulf %43, %43 : vector<16x32xf32>
    %cst_14 = arith.constant dense<0.000000e+00> : vector<16xf32>
    %45 = vector.multi_reduction <add>, %44, %cst_14 [1] : vector<16x32xf32> to vector<16xf32>
    %46 = vector.shape_cast %45 : vector<16xf32> to vector<16x1xf32>
    %cst_15 = arith.constant 3.200000e+01 : f32
    %47 = vector.broadcast %cst_15 : f32 to vector<16x1xf32>
    %48 = arith.divf %46, %47 : vector<16x1xf32>
    %49 = vector.broadcast %41 : vector<16x1xf32> to vector<16x32xf32>
    %50 = arith.subf %37, %49 : vector<16x32xf32>
    %cst_16 = arith.constant 9.99999974E-6 : f32
    %51 = vector.broadcast %cst_16 : f32 to vector<16x1xf32>
    %52 = arith.addf %48, %51 : vector<16x1xf32>
    %53 = math.rsqrt %52 : vector<16x1xf32>
    %54 = vector.broadcast %53 : vector<16x1xf32> to vector<16x32xf32>
    %55 = arith.mulf %50, %54 : vector<16x32xf32>
    %56 = vector.broadcast %8 : vector<1x32xf32> to vector<16x32xf32>
    %57 = arith.mulf %55, %56 : vector<16x32xf32>
    %58 = vector.broadcast %9 : vector<1x32xf32> to vector<16x32xf32>
    %59 = arith.addf %57, %58 : vector<16x32xf32>
    %cst_17 = arith.constant 0.000000e+00 : f32
    %60 = vector.broadcast %cst_17 : f32 to vector<16x32xf32>
    %61 = arith.maximumf %59, %60 : vector<16x32xf32>
    %cst_18 = arith.constant dense<0.000000e+00> : vector<16x32xf32>
    %62 = tpu.matmul %61, %3, %cst_18 {dimension_numbers = #tpu.dot_dimension_numbers<[1], [0], [0], [1], [0, 0, 1, 1], [], []>} : vector<16x32xf32>, vector<32x32xf32>, vector<16x32xf32> -> vector<16x32xf32>
    %63 = vector.broadcast %10 : vector<1x32xf32> to vector<16x32xf32>
    %64 = arith.addf %62, %63 : vector<16x32xf32>
    %cst_19 = arith.constant dense<0.000000e+00> : vector<16xf32>
    %65 = vector.multi_reduction <add>, %64, %cst_19 [1] : vector<16x32xf32> to vector<16xf32>
    %66 = vector.shape_cast %65 : vector<16xf32> to vector<16x1xf32>
    %cst_20 = arith.constant 3.200000e+01 : f32
    %67 = vector.broadcast %cst_20 : f32 to vector<16x1xf32>
    %68 = arith.divf %66, %67 : vector<16x1xf32>
    %69 = vector.broadcast %68 : vector<16x1xf32> to vector<16x32xf32>
    %70 = arith.subf %64, %69 : vector<16x32xf32>
    %71 = arith.mulf %70, %70 : vector<16x32xf32>
    %cst_21 = arith.constant dense<0.000000e+00> : vector<16xf32>
    %72 = vector.multi_reduction <add>, %71, %cst_21 [1] : vector<16x32xf32> to vector<16xf32>
    %73 = vector.shape_cast %72 : vector<16xf32> to vector<16x1xf32>
    %cst_22 = arith.constant 3.200000e+01 : f32
    %74 = vector.broadcast %cst_22 : f32 to vector<16x1xf32>
    %75 = arith.divf %73, %74 : vector<16x1xf32>
    %76 = vector.broadcast %68 : vector<16x1xf32> to vector<16x32xf32>
    %77 = arith.subf %64, %76 : vector<16x32xf32>
    %cst_23 = arith.constant 9.99999974E-6 : f32
    %78 = vector.broadcast %cst_23 : f32 to vector<16x1xf32>
    %79 = arith.addf %75, %78 : vector<16x1xf32>
    %80 = math.rsqrt %79 : vector<16x1xf32>
    %81 = vector.broadcast %80 : vector<16x1xf32> to vector<16x32xf32>
    %82 = arith.mulf %77, %81 : vector<16x32xf32>
    %83 = vector.broadcast %11 : vector<1x32xf32> to vector<16x32xf32>
    %84 = arith.mulf %82, %83 : vector<16x32xf32>
    %85 = vector.broadcast %12 : vector<1x32xf32> to vector<16x32xf32>
    %86 = arith.addf %84, %85 : vector<16x32xf32>
    %cst_24 = arith.constant 0.000000e+00 : f32
    %87 = vector.broadcast %cst_24 : f32 to vector<16x32xf32>
    %88 = arith.maximumf %86, %87 : vector<16x32xf32>
    %cst_25 = arith.constant dense<0.000000e+00> : vector<16x32xf32>
    %89 = tpu.matmul %88, %5, %cst_25 {dimension_numbers = #tpu.dot_dimension_numbers<[1], [0], [0], [1], [0, 0, 1, 1], [], []>} : vector<16x32xf32>, vector<32x32xf32>, vector<16x32xf32> -> vector<16x32xf32>
    %90 = vector.broadcast %6 : vector<1x32xf32> to vector<16x32xf32>
    %91 = arith.addf %89, %90 : vector<16x32xf32>
    %c0_26 = arith.constant 0 : index
    %c0_27 = arith.constant 0 : index
    %92 = vector.load %arg8[%c0_26, %c0_27] : memref<16x32xf32, #tpu.memory_space<vmem>>, vector<16x32xf32>
    %93 = arith.addf %92, %91 : vector<16x32xf32>
    %c0_28 = arith.constant 0 : index
    %c0_29 = arith.constant 0 : index
    %94 = vector.load %arg9[%c0_28, %c0_29] : memref<16x32xf32, #tpu.memory_space<vmem>>, vector<16x32xf32>
    tpu.vector_store %arg9[%c0_28, %c0_29], %93 {strides = array<i32>} : memref<16x32xf32, #tpu.memory_space<vmem>>, vector<16x32xf32>,
    return
  }
  func.func @transform_0(%arg0: i32) -> (i32, i32) {
    %c0_i32 = arith.constant 0 : i32
    %c0_i32_0 = arith.constant 0 : i32
    return %arg0, %c0_i32 : i32, i32
  }
  func.func @transform_1(%arg0: i32) -> (i32, i32) {
    %c0_i32 = arith.constant 0 : i32
    %c0_i32_0 = arith.constant 0 : i32
    %c0_i32_1 = arith.constant 0 : i32
    return %c0_i32, %c0_i32_0 : i32, i32
  }
  func.func @transform_2(%arg0: i32) -> (i32, i32) {
    %c0_i32 = arith.constant 0 : i32
    %c0_i32_0 = arith.constant 0 : i32
    %c0_i32_1 = arith.constant 0 : i32
    return %c0_i32, %c0_i32_0 : i32, i32
  }
  func.func @transform_3(%arg0: i32) -> (i32, i32) {
    %c0_i32 = arith.constant 0 : i32
    %c0_i32_0 = arith.constant 0 : i32
    %c0_i32_1 = arith.constant 0 : i32
    return %c0_i32, %c0_i32_0 : i32, i32
  }
  func.func @transform_4(%arg0: i32) -> (i32, i32) {
    %c0_i32 = arith.constant 0 : i32
    %c0_i32_0 = arith.constant 0 : i32
    %c0_i32_1 = arith.constant 0 : i32
    return %c0_i32, %c0_i32_0 : i32, i32
  }
  func.func @transform_5(%arg0: i32) -> (i32, i32) {
    %c0_i32 = arith.constant 0 : i32
    %c0_i32_0 = arith.constant 0 : i32
    %c0_i32_1 = arith.constant 0 : i32
    return %c0_i32, %c0_i32_0 : i32, i32
  }
  func.func @transform_6(%arg0: i32) -> (i32, i32) {
    %c0_i32 = arith.constant 0 : i32
    %c0_i32_0 = arith.constant 0 : i32
    %c0_i32_1 = arith.constant 0 : i32
    return %c0_i32, %c0_i32_0 : i32, i32
  }
  func.func @transform_7(%arg0: i32) -> (i32, i32) {
    %c0_i32 = arith.constant 0 : i32
    %c0_i32_0 = arith.constant 0 : i32
    return %arg0, %c0_i32 : i32, i32
  }
  func.func @transform_8(%arg0: i32) -> (i32, i32) {
    %c0_i32 = arith.constant 0 : i32
    %c0_i32_0 = arith.constant 0 : i32
    return %arg0, %c0_i32 : i32, i32
  }
}

</mosaic_0001>

<llo_original>
// kernel: tpu_custom_call.1
$region0: #{tpu_custom_call.1}
  #allocation0 [shape = 'u32[]', space=smem, size = 0x4, offset = 0x4, fixed_abs, tag = 'smem constant byte address 0x4 - core index']
  #allocation1 [shape = 'u32[72,128]{1,0:T(1,128)}', space=vmem, size = 0x9000, scoped, tag = 'internal scratch']
  %s0 = inlined_call_operand.vmem [shape: f32[16,4], index: 0, kind: input, shape index: {}]
  %s1 = inlined_call_operand.vmem [shape: f32[4,32], index: 1, kind: input, shape index: {}]
  %s2 = inlined_call_operand.vmem [shape: f32[3,32], index: 2, kind: input, shape index: {}]
  %s3 = inlined_call_operand.hbm [shape: f32[32,32], index: 3, kind: input, shape index: {}]
  %s4 = inlined_call_operand.hbm [shape: f32[3,32], index: 4, kind: input, shape index: {}]
  %s5 = inlined_call_operand.hbm [shape: f32[32,32], index: 5, kind: input, shape index: {}]
  %s6 = inlined_call_operand.vmem [shape: f32[1,32], index: 6, kind: input, shape index: {}]
  %s7 = inlined_call_operand.vmem [shape: f32[16,32], index: 7, kind: input, shape index: {}]
  %s8 = inlined_call_operand.hbm [shape: f32[16,32], index: 8, kind: output, shape index: {}]
  %s9 = sld [smem:[#allocation0]]
  $region54: #{tpu_custom_call.1} parent=0
    _
  %s11 = ssub.s32 1, %s9
  %s12 = scalar_select 0, %s11, %s9
  $region1: #{tpu_custom_call.1} parent=0
    #allocation2 [shape = 'u8[16384]{0}', space=vmem, size = 0x4000, scoped, tag = 'input window, operand 3, single buffered']
    #allocation3 [shape = 's32[1]{0}', space=sflag, size = 0x4, scoped, tag = 'scoped memory for tpu_custom_call.1']
    #allocation4 [shape = 's32[1]{0}', space=sflag, size = 0x4, scoped, tag = 'scoped memory for tpu_custom_call.1']
    #allocation5 [shape = 'u8[2048]{0}', space=vmem, size = 0x800, scoped, tag = 'input window, operand 4, single buffered']
    #allocation6 [shape = 's32[1]{0}', space=sflag, size = 0x4, scoped, tag = 'scoped memory for tpu_custom_call.1']
    #allocation7 [shape = 'u8[16384]{0}', space=vmem, size = 0x4000, scoped, tag = 'input window, operand 5, single buffered']
    #allocation8 [shape = 'u8[8192]{0}', space=vmem, size = 0x2000, scoped, tag = 'output window, operand 0, single buffered']
    %13 = vsyncpa [#allocation3], 0
    %14 = vsyncpa [#allocation6], 0
    %15 = vsyncpa [#allocation4], 0
    // Predicated region
    $region2: #{tpu_custom_call.1} parent=1 // pred_check
      _
    $region3: #{tpu_custom_call.1} parent=1 // pred_check_branch
      %17 = sbr.rel (0) target = $region5
    $region4: #{tpu_custom_call.1} parent=1 // pred_region
      _
    $region5: #{tpu_custom_call.1} parent=1 // pred_fallthru
      _
    // Predicated region
    $region6: #{tpu_custom_call.1} parent=1 // pred_check
      _
    $region7: #{tpu_custom_call.1} parent=1 // pred_check_branch
      %19 = sbr.rel (0) target = $region9
    $region8: #{tpu_custom_call.1} parent=1 // pred_region
      _
    $region9: #{tpu_custom_call.1} parent=1 // pred_fallthru
      _
    // Predicated region
    $region10: #{tpu_custom_call.1} parent=1 // pred_check
      _
    $region11: #{tpu_custom_call.1} parent=1 // pred_check_branch
      %21 = sbr.rel (0) target = $region13
    $region12: #{tpu_custom_call.1} parent=1 // pred_region
      _
    $region13: #{tpu_custom_call.1} parent=1 // pred_fallthru
      _
    // Predicated region
    $region14: #{tpu_custom_call.1} parent=1 // pred_check
      _
    $region15: #{tpu_custom_call.1} parent=1 // pred_check_branch
      %23 = sbr.rel (0) target = $region17
    $region16: #{tpu_custom_call.1} parent=1 // pred_region
      %25 = vsyncadd [#allocation3], 0
      %s26 = sshll.u32 %s3, 4
      %s27 = int_to_ptr.hbm [resolvable:$true] %s26
      %s28 = sshll.u32 [#allocation2], 4
      %s29 = int_to_ptr.vmem [resolvable:$true] %s28
      %34 = dma.hbm_to_vmem [thread:$0]  %s27, 512, %s29, [#allocation3], 128, 128, 8
    $region17: #{tpu_custom_call.1} parent=1 // pred_fallthru
      _
    // Predicated region
    $region18: #{tpu_custom_call.1} parent=1 // pred_check
      _
    $region19: #{tpu_custom_call.1} parent=1 // pred_check_branch
      %36 = sbr.rel (0) target = $region21
    $region20: #{tpu_custom_call.1} parent=1 // pred_region
      %38 = vsyncadd [#allocation6], 0
      %s40 = sshll.u32 %s4, 4
      %s41 = int_to_ptr.hbm [resolvable:$true] %s40
      %s42 = sshll.u32 [#allocation5], 4
      %s43 = int_to_ptr.vmem [resolvable:$true] %s42
      %45 = dma.hbm_to_vmem [thread:$0]  %s41, 64, %s43, [#allocation6]
    $region21: #{tpu_custom_call.1} parent=1 // pred_fallthru
      _
    // Predicated region
    $region22: #{tpu_custom_call.1} parent=1 // pred_check
      _
    $region23: #{tpu_custom_call.1} parent=1 // pred_check_branch
      %47 = sbr.rel (0) target = $region25
    $region24: #{tpu_custom_call.1} parent=1 // pred_region
      %49 = vsyncadd [#allocation6], 0
      %s50 = sshll.u32 %s5, 4
      %s51 = int_to_ptr.hbm [resolvable:$true] %s50
      %s52 = sshll.u32 [#allocation7], 4
      %s53 = int_to_ptr.vmem [resolvable:$true] %s52
      %58 = dma.hbm_to_vmem [thread:$0]  %s51, 512, %s53, [#allocation6], 128, 128, 8
    $region25: #{tpu_custom_call.1} parent=1 // pred_fallthru
      _
    // Predicated region
    $region26: #{tpu_custom_call.1} parent=1 // pred_check
      _
    $region27: #{tpu_custom_call.1} parent=1 // pred_check_branch
      %60 = sbr.rel (0) target = $region29
    $region28: #{tpu_custom_call.1} parent=1 // pred_region
      _
    $region29: #{tpu_custom_call.1} parent=1 // pred_fallthru
      _
    // Predicated region
    $region30: #{tpu_custom_call.1} parent=1 // pred_check
      _
    $region31: #{tpu_custom_call.1} parent=1 // pred_check_branch
      %62 = sbr.rel (0) target = $region33
    $region32: #{tpu_custom_call.1} parent=1 // pred_region
      _
    $region33: #{tpu_custom_call.1} parent=1 // pred_fallthru
      _
    // Predicated region
    $region34: #{tpu_custom_call.1} parent=1 // pred_check
      _
    $region35: #{tpu_custom_call.1} parent=1 // pred_check_branch
      %64 = sbr.rel (0) target = $region37
    $region36: #{tpu_custom_call.1} parent=1 // pred_region
      %66 = dma.done [#allocation3], 512
    $region37: #{tpu_custom_call.1} parent=1 // pred_fallthru
      _
    // Predicated region
    $region38: #{tpu_custom_call.1} parent=1 // pred_check
      _
    $region39: #{tpu_custom_call.1} parent=1 // pred_check_branch
      %68 = sbr.rel (0) target = $region41
    $region40: #{tpu_custom_call.1} parent=1 // pred_region
      %70 = dma.done [#allocation6], 64
    $region41: #{tpu_custom_call.1} parent=1 // pred_fallthru
      _
    // Predicated region
    $region42: #{tpu_custom_call.1} parent=1 // pred_check
      _
    $region43: #{tpu_custom_call.1} parent=1 // pred_check_branch
      %72 = sbr.rel (0) target = $region45
    $region44: #{tpu_custom_call.1} parent=1 // pred_region
      %74 = dma.done [#allocation6], 512
    $region45: #{tpu_custom_call.1} parent=1 // pred_fallthru
      _
    %v75 = vld [vmem:[%s0] sm:$0xff]
    %v76 = vld [vmem:[%s0 + $0x8] sm:$0xff]
    %v77 = vld [vmem:[%s1] sm:$0xf]
    %v78 = vld [vmem:[%s2] sm:$0x7]
    %v79 = vld [vmem:[#allocation2] sm:$0xff]
    %v80 = vld [vmem:[#allocation2 + $0x8] sm:$0xff]
    %v81 = vld [vmem:[#allocation2 + $0x10] sm:$0xff]
    %v82 = vld [vmem:[#allocation2 + $0x18] sm:$0xff]
    %v83 = vld [vmem:[#allocation5] sm:$0x7]
    %v84 = vld [vmem:[#allocation7] sm:$0xff]
    %v85 = vld [vmem:[#allocation7 + $0x8] sm:$0xff]
    %v86 = vld [vmem:[#allocation7 + $0x10] sm:$0xff]
    %v87 = vld [vmem:[#allocation7 + $0x18] sm:$0xff]
    %v88 = vld [vmem:[%s6] sm:$0x1]
    %90 = vset.pattern.permute.xlu0 0
    %91 = vperm.xlu0 %90, %v75
    %v92 = vpop.permute.xlu0 %91
    %95 = vset.pattern.permute.xlu0 0
    %96 = vperm.xlu0 %95, %v76
    %v97 = vpop.permute.xlu0 %96
    %v99 = vperm.slane %v77, 0
    %v100 = vmul.f32 %v92, %v99
    %v101 = vmul.f32 %v97, %v99
    %102 = vset.pattern.permute.xlu0 1
    %103 = vperm.xlu0 %102, %v75
    %v104 = vpop.permute.xlu0 %103
    %106 = vset.pattern.permute.xlu0 1
    %107 = vperm.xlu0 %106, %v76
    %v108 = vpop.permute.xlu0 %107
    %v110 = vperm.slane %v77, 1
    %v111 = vmul.f32 %v104, %v110
    %v112 = vmul.f32 %v108, %v110
    %v113 = vadd.f32 %v100, %v111
    %v114 = vadd.f32 %v101, %v112
    %115 = vset.pattern.permute.xlu0 2
    %116 = vperm.xlu0 %115, %v75
    %v117 = vpop.permute.xlu0 %116
    %119 = vset.pattern.permute.xlu0 2
    %120 = vperm.xlu0 %119, %v76
    %v121 = vpop.permute.xlu0 %120
    %v123 = vperm.slane %v77, 2
    %v124 = vmul.f32 %v117, %v123
    %v125 = vmul.f32 %v121, %v123
    %v126 = vadd.f32 %v113, %v124
    %v127 = vadd.f32 %v114, %v125
    %128 = vset.pattern.permute.xlu0 3
    %129 = vperm.xlu0 %128, %v75
    %v130 = vpop.permute.xlu0 %129
    %132 = vset.pattern.permute.xlu0 3
    %133 = vperm.xlu0 %132, %v76
    %v134 = vpop.permute.xlu0 %133
    %v136 = vperm.slane %v77, 3
    %v137 = vmul.f32 %v130, %v136
    %v138 = vmul.f32 %v134, %v136
    %v139 = vadd.f32 %v126, %v137
    %v140 = vadd.f32 %v127, %v138
    %v141 = vperm.slane %v78, 0
    %v142 = vadd.f32 %v139, %v141
    %v143 = vadd.f32 %v140, %v141
    %vm144 = vcmask 261120
    %v145 = vsel %vm144, %v142, 0.0
    %146 = vadd.xlane.f32.xlu0 %v145
    %v147 = vpop.xlane.xlu0 %146
    %v148 = vsel %vm144, %v143, 0.0
    %149 = vadd.xlane.f32.xlu0 %v148
    %v150 = vpop.xlane.xlu0 %149
    %v151 = vrcp.pop 32.0
    %v152 = vmul.f32 32.0, %v151
    %v153 = vsub.f32 1.0, %v152
    %v154 = vmul.f32 %v151, %v153
    %v155 = vadd.f32 %v151, %v154
    %vm156 = vweird.f32 %v151
    %v157 = vsel %vm156, %v151, %v155
    %v158 = vmul.f32 %v147, %v157
    %v159 = vmul.f32 %v150, %v157
    %v160 = vsub.f32 %v142, %v158
    %v161 = vsub.f32 %v143, %v159
    %v162 = vmul.f32 %v160, %v160
    %v163 = vmul.f32 %v161, %v161
    %v164 = vsel %vm144, %v162, 0.0
    %165 = vadd.xlane.f32.xlu0 %v164
    %v166 = vpop.xlane.xlu0 %165
    %v167 = vsel %vm144, %v163, 0.0
    %168 = vadd.xlane.f32.xlu0 %v167
    %v169 = vpop.xlane.xlu0 %168
    %v170 = vmul.f32 %v166, %v157
    %v171 = vmul.f32 %v169, %v157
    %v172 = vadd.f32 %v170, 1e-05
    %v173 = vadd.f32 %v171, 1e-05
    %v174 = vrsqrt.pop %v172
    %v175 = vmul.f32 %v174, %v172
    %v176 = vmul.f32 %v175, %v174
    %v177 = vmul.f32 0.5, %v176
    %v178 = vsub.f32 1.5, %v177
    %v179 = vmul.f32 %v174, %v178
    %vm180 = vweird.f32 %v172
    %vm181 = vweird.f32 %v174
    %vm182 = vmor %vm180, %vm181
    %v183 = vsel %vm182, %v174, %v179
    %v184 = vrsqrt.pop %v173
    %v185 = vmul.f32 %v184, %v173
    %v186 = vmul.f32 %v185, %v184
    %v187 = vmul.f32 0.5, %v186
    %v188 = vsub.f32 1.5, %v187
    %v189 = vmul.f32 %v184, %v188
    %vm190 = vweird.f32 %v173
    %vm191 = vweird.f32 %v184
    %vm192 = vmor %vm190, %vm191
    %v193 = vsel %vm192, %v184, %v189
    %v194 = vmul.f32 %v160, %v183
    %v195 = vmul.f32 %v161, %v193
    %v196 = vperm.slane %v78, 1
    %v197 = vmul.f32 %v194, %v196
    %v198 = vmul.f32 %v195, %v196
    %v199 = vperm.slane %v78, 2
    %v200 = vadd.f32 %v197, %v199
    %v201 = vadd.f32 %v198, %v199
    %v202 = vmax.f32 %v200, 0.0
    %v203 = vmax.f32 %v201, 0.0
    %v204 = vperm.slane %v83, 0
    %v206 = vsel %vm144, %v202, 0
    %v209 = vsel %vm144, %v203, 0
    %211 = vmatpush.msra.mxu0 0.0
    %212 = vmatpush.msra.mxu0 0.0
    %213 = vmatpush.msra.mxu0 0.0
    %214 = vmatpush.msra.mxu0 0.0
    %215 = vmatpush.msra.mxu0 0.0
    %216 = vmatpush.msra.mxu0 0.0
    %217 = vmatpush.msra.mxu0 0.0
    %218 = vmatpush.msra.mxu0 0.0
    %219 = vmatpush.msra.mxu0 0.0
    %220 = vmatpush.msra.mxu0 0.0
    %221 = vmatpush.msra.mxu0 0.0
    %222 = vmatpush.msra.mxu0 0.0
    %223 = vmatpush.msra.mxu0 %v82
    %224 = vmatpush.msra.mxu0 %v81
    %225 = vmatpush.msra.mxu0 %v80
    %226 = vmatpush.msra.mxu0 %v79
    %227 = vmatmul.f32.gmra.mxu0 %v206
    %v228 = vpop.f32.mrf.mxu0
    %v229 = vadd.f32 %v204, %v228
    %230 = vmatmul.f32.gmra.mxu0 %v209
    %v231 = vpop.f32.mrf.mxu0
    %v232 = vadd.f32 %v204, %v231
    %233 = vdwg.mxu0
    %v234 = vsel %vm144, %v229, 0.0
    %235 = vadd.xlane.f32.xlu0 %v234
    %v236 = vpop.xlane.xlu0 %235
    %v237 = vsel %vm144, %v232, 0.0
    %238 = vadd.xlane.f32.xlu0 %v237
    %v239 = vpop.xlane.xlu0 %238
    %v240 = vmul.f32 %v236, %v157
    %v241 = vmul.f32 %v239, %v157
    %v242 = vsub.f32 %v229, %v240
    %v243 = vsub.f32 %v232, %v241
    %v244 = vmul.f32 %v242, %v242
    %v245 = vmul.f32 %v243, %v243
    %v246 = vsel %vm144, %v244, 0.0
    %247 = vadd.xlane.f32.xlu0 %v246
    %v248 = vpop.xlane.xlu0 %247
    %v249 = vsel %vm144, %v245, 0.0
    %250 = vadd.xlane.f32.xlu0 %v249
    %v251 = vpop.xlane.xlu0 %250
    %v252 = vmul.f32 %v248, %v157
    %v253 = vmul.f32 %v251, %v157
    %v254 = vadd.f32 %v252, 1e-05
    %v255 = vadd.f32 %v253, 1e-05
    %v256 = vrsqrt.pop %v254
    %v257 = vmul.f32 %v256, %v254
    %v258 = vmul.f32 %v257, %v256
    %v259 = vmul.f32 0.5, %v258
    %v260 = vsub.f32 1.5, %v259
    %v261 = vmul.f32 %v256, %v260
    %vm262 = vweird.f32 %v254
    %vm263 = vweird.f32 %v256
    %vm264 = vmor %vm262, %vm263
    %v265 = vsel %vm264, %v256, %v261
    %v266 = vrsqrt.pop %v255
    %v267 = vmul.f32 %v266, %v255
    %v268 = vmul.f32 %v267, %v266
    %v269 = vmul.f32 0.5, %v268
    %v270 = vsub.f32 1.5, %v269
    %v271 = vmul.f32 %v266, %v270
    %vm272 = vweird.f32 %v255
    %vm273 = vweird.f32 %v266
    %vm274 = vmor %vm272, %vm273
    %v275 = vsel %vm274, %v266, %v271
    %v276 = vmul.f32 %v242, %v265
    %v277 = vmul.f32 %v243, %v275
    %v278 = vperm.slane %v83, 1
    %v279 = vmul.f32 %v276, %v278
    %v280 = vmul.f32 %v277, %v278
    %v281 = vperm.slane %v83, 2
    %v282 = vadd.f32 %v279, %v281
    %v283 = vadd.f32 %v280, %v281
    %v284 = vmax.f32 %v282, 0.0
    %v285 = vmax.f32 %v283, 0.0
    %v287 = vperm.slane %v88, 0
    %v290 = vsel %vm144, %v284, 0
    %v293 = vsel %vm144, %v285, 0
    %295 = vmatpush.msra.mxu0 0.0
    %296 = vmatpush.msra.mxu0 0.0
    %297 = vmatpush.msra.mxu0 0.0
    %298 = vmatpush.msra.mxu0 0.0
    %299 = vmatpush.msra.mxu0 0.0
    %300 = vmatpush.msra.mxu0 0.0
    %301 = vmatpush.msra.mxu0 0.0
    %302 = vmatpush.msra.mxu0 0.0
    %303 = vmatpush.msra.mxu0 0.0
    %304 = vmatpush.msra.mxu0 0.0
    %305 = vmatpush.msra.mxu0 0.0
    %306 = vmatpush.msra.mxu0 0.0
    %307 = vmatpush.msra.mxu0 %v87
    %308 = vmatpush.msra.mxu0 %v86
    %309 = vmatpush.msra.mxu0 %v85
    %310 = vmatpush.msra.mxu0 %v84
    %311 = vmatmul.f32.gmra.mxu0 %v290
    %v312 = vpop.f32.mrf.mxu0
    %v313 = vadd.f32 %v287, %v312
    %314 = vmatmul.f32.gmra.mxu0 %v293
    %v315 = vpop.f32.mrf.mxu0
    %v316 = vadd.f32 %v287, %v315
    %317 = vdwg.mxu0
    %v318 = vld [vmem:[%s7] sm:$0xff]
    %v319 = vld [vmem:[%s7 + $0x8] sm:$0xff]
    %v320 = vadd.f32 %v318, %v313
    %v321 = vadd.f32 %v319, %v316
    %322 = vst.msk [vmem:[#allocation8] sm:$0xff] %vm144, %v320
    %323 = vst.msk [vmem:[#allocation8 + $0x8] sm:$0xff] %vm144, %v321
    // Predicated region
    $region46: #{tpu_custom_call.1} parent=1 // pred_check
      _
    $region47: #{tpu_custom_call.1} parent=1 // pred_check_branch
      %325 = sbr.rel (0) target = $region49
    $region48: #{tpu_custom_call.1} parent=1 // pred_region
      %327 = vsyncadd [#allocation4], 0
      %s328 = sshll.u32 [#allocation8], 4
      %s329 = int_to_ptr.vmem [resolvable:$true] %s328
      %s330 = sshll.u32 %s8, 4
      %s331 = int_to_ptr.hbm [resolvable:$true] %s330
      %336 = dma.vmem_to_hbm [thread:$0]  %s329, 256, %s331, [#allocation4], 128, 128, 8
    $region49: #{tpu_custom_call.1} parent=1 // pred_fallthru
      _
    // Predicated region
    $region50: #{tpu_custom_call.1} parent=1 // pred_check
      _
    $region51: #{tpu_custom_call.1} parent=1 // pred_check_branch
      %338 = sbr.rel (0) target = $region53
    $region52: #{tpu_custom_call.1} parent=1 // pred_region
      %340 = dma.done [#allocation4], 256
    $region53: #{tpu_custom_call.1} parent=1 // pred_fallthru
      _
    %341 = vsyncpa [#allocation3], 1
    %342 = vsyncpa [#allocation6], 1
    %343 = vsyncpa [#allocation4], 1

</llo_original>
